<compile_context>
chip_gen: v7x
topology: tpu7x:2x2x1
jax: 0.10.0
libtpu: 0.0.40
codegen_flags: <defaults>
</compile_context>

<pallas_src>
import jax
import jax.numpy as jnp
from jax.experimental import pallas as pl

NN_WIDTH = 30
NN_NUM_LAYERS = 4
BATCH = 100        # params['batchSize']

B_PAD = 128        # batch padded to one full lane width
W_PAD = 128        # feature width padded to one full lane width
N_HIDDEN_MM = NN_NUM_LAYERS - 1   # three full-width hidden matmuls

# Packed parameter slab layout (single slab -> single DMA):
#   rows [i*W_PAD : (i+1)*W_PAD]  -> hidden-layer weight i (i = 0..2)
#   row  VEC_BASE + _ROW_W0       -> first-layer weight (1, 30) as a row
#   rows VEC_BASE + _ROW_B0.._B3  -> biases b0..b3
#   row  VEC_BASE + _ROW_W4       -> last-layer weight (30, 1) as a row
#   row  VEC_BASE + _ROW_B4       -> b4 replicated across all 128 lanes
VEC_BASE = N_HIDDEN_MM * W_PAD                      # 384 (8-aligned)
_ROW_W0, _ROW_B0, _ROW_B1, _ROW_B2, _ROW_B3, _ROW_W4, _ROW_B4 = range(7)
PARAM_ROWS = VEC_BASE + 8                           # 392 (multiple of 8)


def _net1_kernel(x_ref, p_ref, o_ref):
    def vrow(r):
        r += VEC_BASE
        return p_ref[r:r + 1, :]                     # (1, W_PAD) static slice

    # ---- layer 0: (B,1) @ (1,W) is degenerate on the MXU; do it on the VPU.
    x_col = x_ref[...]                               # (B_PAD, 1)
    h = jnp.tanh(x_col * vrow(_ROW_W0) + vrow(_ROW_B0))        # (B_PAD, W_PAD)

    # ---- hidden layers 1..3: real MXU matmuls (zero padding is neutral).
    for i, brow in enumerate((_ROW_B1, _ROW_B2, _ROW_B3)):
        w = p_ref[i * W_PAD:(i + 1) * W_PAD, :]      # (W_PAD, W_PAD) view
        h = jnp.tanh(
            jnp.dot(h, w, preferred_element_type=jnp.float32) + vrow(brow))

    # ---- output layer: contract the lane (feature) axis against the w4 row
    # so the result lands lane-dense as (1, B_PAD) instead of a (B_PAD, 1)
    # column of masked partial stores.
    out_row = jnp.einsum('ow,bw->ob', vrow(_ROW_W4), h,
                         preferred_element_type=jnp.float32) + vrow(_ROW_B4)
    # positive=False in the reference module -> no softplus.
    # Sublane-broadcast so the store is one full unmasked (8, 128) slab.
    o_ref[...] = jnp.broadcast_to(out_row, o_ref.shape).astype(o_ref.dtype)


def pack_params(params):
    """Pack the 5 (w, b) pairs into one zero-padded slab (done once)."""
    (w0, b0), (w1, b1), (w2, b2), (w3, b3), (w4, b4) = params
    slab = jnp.zeros((PARAM_ROWS, W_PAD), jnp.float32)
    for i, w in enumerate((w1, w2, w3)):
        slab = slab.at[i * W_PAD:i * W_PAD + w.shape[0], :w.shape[1]].set(w)
    slab = slab.at[VEC_BASE + _ROW_W0, :w0.shape[1]].set(w0[0, :])
    slab = slab.at[VEC_BASE + _ROW_B0, :b0.shape[0]].set(b0)
    slab = slab.at[VEC_BASE + _ROW_B1, :b1.shape[0]].set(b1)
    slab = slab.at[VEC_BASE + _ROW_B2, :b2.shape[0]].set(b2)
    slab = slab.at[VEC_BASE + _ROW_B3, :b3.shape[0]].set(b3)
    slab = slab.at[VEC_BASE + _ROW_W4, :w4.shape[0]].set(w4[:, 0])
    slab = slab.at[VEC_BASE + _ROW_B4, :].set(b4[0])
    return slab


@jax.jit
def net1_forward(x, param_slab):
    """x: (B, 1) float32; param_slab: (392, 128) float32."""
    b = x.shape[0]
    # Zero-pad the batch to 128 rows outside the kernel (numerically neutral;
    # padded rows are discarded below).
    x_pad = jnp.zeros((B_PAD, 1), jnp.float32).at[:b, :].set(x)
    out_slab = pl.pallas_call(
        _net1_kernel,
        out_shape=jax.ShapeDtypeStruct((8, B_PAD), jnp.float32),
        grid=(),
        in_specs=[
            pl.BlockSpec((B_PAD, 1), lambda: (0, 0)),
            pl.BlockSpec((PARAM_ROWS, W_PAD), lambda: (0, 0)),
        ],
        out_specs=pl.BlockSpec((8, B_PAD), lambda: (0, 0)),
    )(x_pad, param_slab)
    # Row 0 holds the lane-dense predictions; slice back to (B, 1).
    return out_slab[0, :b].reshape(b, 1)


def init_params(key, nn_width=NN_WIDTH, nn_num_layers=NN_NUM_LAYERS):
    """Deterministic init mirroring Net1.__init__ shapes.

    First layer uses Xavier-normal (as in the PyTorch code); others use a
    simple fan-in scaled uniform (PyTorch Linear default style).
    Weights are returned as (in, out), i.e. transposed vs torch.nn.Linear.
    """
    dims = [1] + [nn_width] * nn_num_layers + [1]
    params = []
    for i, (fan_in, fan_out) in enumerate(zip(dims[:-1], dims[1:])):
        key, kw, kb = jax.random.split(key, 3)
        if i == 0:
            std = (2.0 / (fan_in + fan_out)) ** 0.5  # xavier_normal_
            w = std * jax.random.normal(kw, (fan_in, fan_out), jnp.float32)
        else:
            bound = 1.0 / (fan_in ** 0.5)
            w = jax.random.uniform(kw, (fan_in, fan_out), jnp.float32,
                                   minval=-bound, maxval=bound)
        bound_b = 1.0 / (fan_in ** 0.5)
        bias = jax.random.uniform(kb, (fan_out,), jnp.float32,
                                  minval=-bound_b, maxval=bound_b)
        params.append((w, bias))
    return params


def reference_forward(x, params):
    h = x
    for w, bias in params[:-1]:
        h = jnp.tanh(h @ w + bias)
    w, bias = params[-1]
    return h @ w + bias


if __name__ == "__main__":
    key = jax.random.PRNGKey(0)
    key, kx = jax.random.split(key)
    # Net1 consumes a single scalar feature per sample: shape (batch, 1).
    x = jax.random.uniform(kx, (BATCH, 1), jnp.float32, minval=0.01, maxval=0.99)

    params = init_params(key)
    param_slab = pack_params(params)   # packed once, reused per call

    out = net1_forward(x, param_slab)
    out = jax.block_until_ready(out)

    ref = reference_forward(x, params)
    assert out.shape == (BATCH, 1), out.shape
    max_err = float(jnp.max(jnp.abs(out - ref)))
    assert jnp.allclose(out, ref, atol=5e-5, rtol=5e-5), max_err

    print("KERNEL_OK")
</pallas_src>

<mosaic_0001>
module attributes {stable_mosaic.version = 11 : i64} {
  func.func @_net1_kernel(%arg0: memref<128x1xf32, #tpu.memory_space<vmem>>, %arg1: memref<392x128xf32, #tpu.memory_space<vmem>>, %arg2: memref<8x128xf32, #tpu.memory_space<vmem>>) attributes {dimension_semantics = [], scalar_prefetch = 0 : i64, scratch_operands = 0 : i64, tpu.core_type = #tpu.core_type<tc>} {
    %c0 = arith.constant 0 : index
    %c0_0 = arith.constant 0 : index
    %0 = vector.load %arg0[%c0, %c0_0] : memref<128x1xf32, #tpu.memory_space<vmem>>, vector<128x1xf32>
    %c384 = arith.constant 384 : index
    %c0_1 = arith.constant 0 : index
    %1 = vector.load %arg1[%c384, %c0_1] : memref<392x128xf32, #tpu.memory_space<vmem>>, vector<1x128xf32>
    %2 = vector.broadcast %0 : vector<128x1xf32> to vector<128x128xf32>
    %3 = vector.broadcast %1 : vector<1x128xf32> to vector<128x128xf32>
    %4 = arith.mulf %2, %3 : vector<128x128xf32>
    %c385 = arith.constant 385 : index
    %c0_2 = arith.constant 0 : index
    %5 = vector.load %arg1[%c385, %c0_2] : memref<392x128xf32, #tpu.memory_space<vmem>>, vector<1x128xf32>
    %6 = vector.broadcast %5 : vector<1x128xf32> to vector<128x128xf32>
    %7 = arith.addf %4, %6 : vector<128x128xf32>
    %8 = math.tanh %7 : vector<128x128xf32>
    %c0_3 = arith.constant 0 : index
    %c0_4 = arith.constant 0 : index
    %9 = vector.load %arg1[%c0_3, %c0_4] : memref<392x128xf32, #tpu.memory_space<vmem>>, vector<128x128xf32>
    %cst = arith.constant dense<0.000000e+00> : vector<128x128xf32>
    %10 = tpu.matmul %8, %9, %cst {dimension_numbers = #tpu.dot_dimension_numbers<[1], [0], [0], [1], [0, 0, 1, 1], [], []>} : vector<128x128xf32>, vector<128x128xf32>, vector<128x128xf32> -> vector<128x128xf32>
    %c386 = arith.constant 386 : index
    %c0_5 = arith.constant 0 : index
    %11 = vector.load %arg1[%c386, %c0_5] : memref<392x128xf32, #tpu.memory_space<vmem>>, vector<1x128xf32>
    %12 = vector.broadcast %11 : vector<1x128xf32> to vector<128x128xf32>
    %13 = arith.addf %10, %12 : vector<128x128xf32>
    %14 = math.tanh %13 : vector<128x128xf32>
    %c128 = arith.constant 128 : index
    %c0_6 = arith.constant 0 : index
    %15 = vector.load %arg1[%c128, %c0_6] : memref<392x128xf32, #tpu.memory_space<vmem>>, vector<128x128xf32>
    %cst_7 = arith.constant dense<0.000000e+00> : vector<128x128xf32>
    %16 = tpu.matmul %14, %15, %cst_7 {dimension_numbers = #tpu.dot_dimension_numbers<[1], [0], [0], [1], [0, 0, 1, 1], [], []>} : vector<128x128xf32>, vector<128x128xf32>, vector<128x128xf32> -> vector<128x128xf32>
    %c387 = arith.constant 387 : index
    %c0_8 = arith.constant 0 : index
    %17 = vector.load %arg1[%c387, %c0_8] : memref<392x128xf32, #tpu.memory_space<vmem>>, vector<1x128xf32>
    %18 = vector.broadcast %17 : vector<1x128xf32> to vector<128x128xf32>
    %19 = arith.addf %16, %18 : vector<128x128xf32>
    %20 = math.tanh %19 : vector<128x128xf32>
    %c256 = arith.constant 256 : index
    %c0_9 = arith.constant 0 : index
    %21 = vector.load %arg1[%c256, %c0_9] : memref<392x128xf32, #tpu.memory_space<vmem>>, vector<128x128xf32>
    %cst_10 = arith.constant dense<0.000000e+00> : vector<128x128xf32>
    %22 = tpu.matmul %20, %21, %cst_10 {dimension_numbers = #tpu.dot_dimension_numbers<[1], [0], [0], [1], [0, 0, 1, 1], [], []>} : vector<128x128xf32>, vector<128x128xf32>, vector<128x128xf32> -> vector<128x128xf32>
    %c388 = arith.constant 388 : index
    %c0_11 = arith.constant 0 : index
    %23 = vector.load %arg1[%c388, %c0_11] : memref<392x128xf32, #tpu.memory_space<vmem>>, vector<1x128xf32>
    %24 = vector.broadcast %23 : vector<1x128xf32> to vector<128x128xf32>
    %25 = arith.addf %22, %24 : vector<128x128xf32>
    %26 = math.tanh %25 : vector<128x128xf32>
    %c389 = arith.constant 389 : index
    %c0_12 = arith.constant 0 : index
    %27 = vector.load %arg1[%c389, %c0_12] : memref<392x128xf32, #tpu.memory_space<vmem>>, vector<1x128xf32>
    "tpu.trace_start"() <{level = 10 : i32, message = "ow,bw->ob"}> : () -> ()
    %cst_13 = arith.constant dense<0.000000e+00> : vector<1x128xf32>
    %28 = tpu.matmul %27, %26, %cst_13 {dimension_numbers = #tpu.dot_dimension_numbers<[1], [1], [0], [0], [0, 0, 1, 0], [], []>} : vector<1x128xf32>, vector<128x128xf32>, vector<1x128xf32> -> vector<1x128xf32>
    "tpu.trace_stop"() : () -> ()
    %c390 = arith.constant 390 : index
    %c0_14 = arith.constant 0 : index
    %29 = vector.load %arg1[%c390, %c0_14] : memref<392x128xf32, #tpu.memory_space<vmem>>, vector<1x128xf32>
    %30 = arith.addf %28, %29 : vector<1x128xf32>
    %31 = vector.shape_cast %30 : vector<1x128xf32> to vector<1x128xf32>
    %32 = vector.broadcast %31 : vector<1x128xf32> to vector<8x128xf32>
    %c0_15 = arith.constant 0 : index
    %c0_16 = arith.constant 0 : index
    %33 = vector.load %arg2[%c0_15, %c0_16] : memref<8x128xf32, #tpu.memory_space<vmem>>, vector<8x128xf32>
    tpu.vector_store %arg2[%c0_15, %c0_16], %32 {strides = array<i32>} : memref<8x128xf32, #tpu.memory_space<vmem>>, vector<8x128xf32>,
    return
  }
}

</mosaic_0001>

<llo_original>
// kernel: net1_forward.1
$region0: #{net1_forward.1}
  #allocation0 [shape = 'u32[]', space=smem, size = 0x4, offset = 0x4, fixed_abs, tag = 'smem constant byte address 0x4 - core index']
  #allocation1 [shape = 'u32[144,128]{1,0:T(1,128)}', space=vmem, size = 0x12000, scoped, tag = 'internal scratch']
  %s0 = inlined_call_operand.vmem [shape: f32[128,1], index: 0, kind: input, shape index: {}]
  %s1 = inlined_call_operand.hbm [shape: f32[392,128], index: 1, kind: input, shape index: {}]
  %s2 = inlined_call_operand.vmem [shape: f32[8,128], index: 2, kind: output, shape index: {}]
  %s3 = sld [smem:[#allocation0]]
  $region22: #{net1_forward.1} parent=0
    _
  %s5 = ssub.s32 1, %s3
  %s6 = scalar_select 0, %s5, %s3
  $region1: #{net1_forward.1} parent=0
    #allocation2 [shape = 'u8[200704]{0}', space=vmem, size = 0x31000, scoped, tag = 'input window, operand 1, single buffered']
    #allocation3 [shape = 's32[1]{0}', space=sflag, size = 0x4, scoped, tag = 'scoped memory for net1_forward.1']
    %7 = vsyncpa [#allocation3], 0
    // Predicated region
    $region2: #{net1_forward.1} parent=1 // pred_check
      _
    $region3: #{net1_forward.1} parent=1 // pred_check_branch
      %9 = sbr.rel (0) target = $region5
    $region4: #{net1_forward.1} parent=1 // pred_region
      _
    $region5: #{net1_forward.1} parent=1 // pred_fallthru
      _
    // Predicated region
    $region6: #{net1_forward.1} parent=1 // pred_check
      _
    $region7: #{net1_forward.1} parent=1 // pred_check_branch
      %11 = sbr.rel (0) target = $region9
    $region8: #{net1_forward.1} parent=1 // pred_region
      %s13 = ssub.s32 6272, 6272
      %14 = vsyncadd [#allocation3], %s13
      %s15 = sshll.u32 [#allocation2], 4
      %s16 = int_to_ptr.vmem [resolvable:$true] %s15
      %21 = dma.hbm_to_vmem [thread:$0]  %s1, 6272, %s16, [#allocation3], 128, 128, 8
    $region9: #{net1_forward.1} parent=1 // pred_fallthru
      _
    // Predicated region
    $region10: #{net1_forward.1} parent=1 // pred_check
      _
    $region11: #{net1_forward.1} parent=1 // pred_check_branch
      %23 = sbr.rel (0) target = $region13
    $region12: #{net1_forward.1} parent=1 // pred_region
      %24 = dma.done [#allocation3], 6272
    $region13: #{net1_forward.1} parent=1 // pred_fallthru
      _
    %v25 = vld [vmem:[%s0] sm:$0xff]
    %v26 = vld [vmem:[%s0 + $0x8] sm:$0xff]
    %v27 = vld [vmem:[%s0 + $0x10] sm:$0xff]
    %v28 = vld [vmem:[%s0 + $0x18] sm:$0xff]
    %v29 = vld [vmem:[%s0 + $0x20] sm:$0xff]
    %v30 = vld [vmem:[%s0 + $0x28] sm:$0xff]
    %v31 = vld [vmem:[%s0 + $0x30] sm:$0xff]
    %v32 = vld [vmem:[%s0 + $0x38] sm:$0xff]
    %v33 = vld [vmem:[%s0 + $0x40] sm:$0xff]
    %v34 = vld [vmem:[%s0 + $0x48] sm:$0xff]
    %v35 = vld [vmem:[%s0 + $0x50] sm:$0xff]
    %v36 = vld [vmem:[%s0 + $0x58] sm:$0xff]
    %v37 = vld [vmem:[%s0 + $0x60] sm:$0xff]
    %v38 = vld [vmem:[%s0 + $0x68] sm:$0xff]
    %v39 = vld [vmem:[%s0 + $0x70] sm:$0xff]
    %v40 = vld [vmem:[%s0 + $0x78] sm:$0xff]
    %v41 = vld [vmem:[#allocation2 + $0x180] sm:$0x1]
    %43 = vset.pattern.permute.xlu0 0
    %44 = vperm.xlu0 %43, %v25
    %v45 = vpop.permute.xlu0 %44
    %48 = vset.pattern.permute.xlu0 0
    %49 = vperm.xlu0 %48, %v26
    %v50 = vpop.permute.xlu0 %49
    %53 = vset.pattern.permute.xlu0 0
    %54 = vperm.xlu0 %53, %v27
    %v55 = vpop.permute.xlu0 %54
    %58 = vset.pattern.permute.xlu0 0
    %59 = vperm.xlu0 %58, %v28
    %v60 = vpop.permute.xlu0 %59
    %63 = vset.pattern.permute.xlu0 0
    %64 = vperm.xlu0 %63, %v29
    %v65 = vpop.permute.xlu0 %64
    %68 = vset.pattern.permute.xlu0 0
    %69 = vperm.xlu0 %68, %v30
    %v70 = vpop.permute.xlu0 %69
    %73 = vset.pattern.permute.xlu0 0
    %74 = vperm.xlu0 %73, %v31
    %v75 = vpop.permute.xlu0 %74
    %78 = vset.pattern.permute.xlu0 0
    %79 = vperm.xlu0 %78, %v32
    %v80 = vpop.permute.xlu0 %79
    %83 = vset.pattern.permute.xlu0 0
    %84 = vperm.xlu0 %83, %v33
    %v85 = vpop.permute.xlu0 %84
    %88 = vset.pattern.permute.xlu0 0
    %89 = vperm.xlu0 %88, %v34
    %v90 = vpop.permute.xlu0 %89
    %93 = vset.pattern.permute.xlu0 0
    %94 = vperm.xlu0 %93, %v35
    %v95 = vpop.permute.xlu0 %94
    %98 = vset.pattern.permute.xlu0 0
    %99 = vperm.xlu0 %98, %v36
    %v100 = vpop.permute.xlu0 %99
    %103 = vset.pattern.permute.xlu0 0
    %104 = vperm.xlu0 %103, %v37
    %v105 = vpop.permute.xlu0 %104
    %108 = vset.pattern.permute.xlu0 0
    %109 = vperm.xlu0 %108, %v38
    %v110 = vpop.permute.xlu0 %109
    %113 = vset.pattern.permute.xlu0 0
    %114 = vperm.xlu0 %113, %v39
    %v115 = vpop.permute.xlu0 %114
    %118 = vset.pattern.permute.xlu0 0
    %119 = vperm.xlu0 %118, %v40
    %v120 = vpop.permute.xlu0 %119
    %v122 = vlaneseq
    %v123 = vshrl.u32 %v122, 7
    %v124 = vsub.s32 0, %v123
    %v125 = vrot.slane %v41, %v124
    %v126 = vmul.f32 %v45, %v125
    %v127 = vmul.f32 %v50, %v125
    %v128 = vmul.f32 %v55, %v125
    %v129 = vmul.f32 %v60, %v125
    %v130 = vmul.f32 %v65, %v125
    %v131 = vmul.f32 %v70, %v125
    %v132 = vmul.f32 %v75, %v125
    %v133 = vmul.f32 %v80, %v125
    %v134 = vmul.f32 %v85, %v125
    %v135 = vmul.f32 %v90, %v125
    %v136 = vmul.f32 %v95, %v125
    %v137 = vmul.f32 %v100, %v125
    %v138 = vmul.f32 %v105, %v125
    %v139 = vmul.f32 %v110, %v125
    %v140 = vmul.f32 %v115, %v125
    %v141 = vmul.f32 %v120, %v125
    %v142 = vld [vmem:[#allocation2 + $0x181] sm:$0x1]
    %v143 = vlaneseq
    %v144 = vshrl.u32 %v143, 7
    %v145 = vsub.s32 0, %v144
    %v146 = vrot.slane %v142, %v145
    %v147 = vadd.f32 %v126, %v146
    %v148 = vadd.f32 %v127, %v146
    %v149 = vadd.f32 %v128, %v146
    %v150 = vadd.f32 %v129, %v146
    %v151 = vadd.f32 %v130, %v146
    %v152 = vadd.f32 %v131, %v146
    %v153 = vadd.f32 %v132, %v146
    %v154 = vadd.f32 %v133, %v146
    %v155 = vadd.f32 %v134, %v146
    %v156 = vadd.f32 %v135, %v146
    %v157 = vadd.f32 %v136, %v146
    %v158 = vadd.f32 %v137, %v146
    %v159 = vadd.f32 %v138, %v146
    %v160 = vadd.f32 %v139, %v146
    %v161 = vadd.f32 %v140, %v146
    %v162 = vadd.f32 %v141, %v146
    %v163 = vtanh.pop %v147
    %v164 = vtanh.pop %v148
    %v165 = vtanh.pop %v149
    %v166 = vtanh.pop %v150
    %v167 = vtanh.pop %v151
    %v168 = vtanh.pop %v152
    %v169 = vtanh.pop %v153
    %v170 = vtanh.pop %v154
    %v171 = vtanh.pop %v155
    %v172 = vtanh.pop %v156
    %v173 = vtanh.pop %v157
    %v174 = vtanh.pop %v158
    %v175 = vtanh.pop %v159
    %v176 = vtanh.pop %v160
    %v177 = vtanh.pop %v161
    %v178 = vtanh.pop %v162
    %v179 = vld [vmem:[#allocation2] sm:$0xff]
    %v180 = vld [vmem:[#allocation2 + $0x8] sm:$0xff]
    %v181 = vld [vmem:[#allocation2 + $0x10] sm:$0xff]
    %v182 = vld [vmem:[#allocation2 + $0x18] sm:$0xff]
    %v183 = vld [vmem:[#allocation2 + $0x20] sm:$0xff]
    %v184 = vld [vmem:[#allocation2 + $0x28] sm:$0xff]
    %v185 = vld [vmem:[#allocation2 + $0x30] sm:$0xff]
    %v186 = vld [vmem:[#allocation2 + $0x38] sm:$0xff]
    %v187 = vld [vmem:[#allocation2 + $0x40] sm:$0xff]
    %v188 = vld [vmem:[#allocation2 + $0x48] sm:$0xff]
    %v189 = vld [vmem:[#allocation2 + $0x50] sm:$0xff]
    %v190 = vld [vmem:[#allocation2 + $0x58] sm:$0xff]
    %v191 = vld [vmem:[#allocation2 + $0x60] sm:$0xff]
    %v192 = vld [vmem:[#allocation2 + $0x68] sm:$0xff]
    %v193 = vld [vmem:[#allocation2 + $0x70] sm:$0xff]
    %v194 = vld [vmem:[#allocation2 + $0x78] sm:$0xff]
    %v195 = vld [vmem:[#allocation2 + $0x182] sm:$0x1]
    %v196 = vlaneseq
    %v197 = vshrl.u32 %v196, 7
    %v198 = vsub.s32 0, %v197
    %v199 = vrot.slane %v195, %v198
    %200 = vmatprep.subr.mxu0 0.0
    %201 = vmatpush1.msra.mxu0 %v179
    %202 = vmatprep.subr.mxu0 0.0
    %203 = vmatpush1.msra.mxu0 %v180
    %204 = vmatprep.subr.mxu0 0.0
    %205 = vmatpush1.msra.mxu0 %v181
    %206 = vmatprep.subr.mxu0 0.0
    %207 = vmatpush1.msra.mxu0 %v182
    %208 = vmatprep.subr.mxu0 0.0
    %209 = vmatpush1.msra.mxu0 %v183
    %210 = vmatprep.subr.mxu0 0.0
    %211 = vmatpush1.msra.mxu0 %v184
    %212 = vmatprep.subr.mxu0 0.0
    %213 = vmatpush1.msra.mxu0 %v185
    %214 = vmatprep.subr.mxu0 0.0
    %215 = vmatpush1.msra.mxu0 %v186
    %216 = vmatprep.subr.mxu0 0.0
    %217 = vmatpush1.msra.mxu0 %v187
    %218 = vmatprep.subr.mxu0 0.0
    %219 = vmatpush1.msra.mxu0 %v188
    %220 = vmatprep.subr.mxu0 0.0
    %221 = vmatpush1.msra.mxu0 %v189
    %222 = vmatprep.subr.mxu0 0.0
    %223 = vmatpush1.msra.mxu0 %v190
    %224 = vmatprep.subr.mxu0 0.0
    %225 = vmatpush1.msra.mxu0 %v191
    %226 = vmatprep.subr.mxu0 0.0
    %227 = vmatpush1.msra.mxu0 %v192
    %228 = vmatprep.subr.mxu0 0.0
    %229 = vmatpush1.msra.mxu0 %v193
    %230 = vmatprep.subr.mxu0 0.0
    %231 = vmatpush1.msra.mxu0 %v194
    %232 = vmatprep.subr.mxu0 0.0
    %233 = vmatpush1.msra.mxu0 0.0
    %234 = vmatprep.subr.mxu0 0.0
    %235 = vmatpush1.msra.mxu0 0.0
    %236 = vmatprep.subr.mxu0 0.0
    %237 = vmatpush1.msra.mxu0 0.0
    %238 = vmatprep.subr.mxu0 0.0
    %239 = vmatpush1.msra.mxu0 0.0
    %240 = vmatprep.subr.mxu0 0.0
    %241 = vmatpush1.msra.mxu0 0.0
    %242 = vmatprep.subr.mxu0 0.0
    %243 = vmatpush1.msra.mxu0 0.0
    %244 = vmatprep.subr.mxu0 0.0
    %245 = vmatpush1.msra.mxu0 0.0
    %246 = vmatprep.subr.mxu0 0.0
    %247 = vmatpush1.msra.mxu0 0.0
    %248 = vmatprep.subr.mxu0 0.0
    %249 = vmatpush1.msra.mxu0 0.0
    %250 = vmatprep.subr.mxu0 0.0
    %251 = vmatpush1.msra.mxu0 0.0
    %252 = vmatprep.subr.mxu0 0.0
    %253 = vmatpush1.msra.mxu0 0.0
    %254 = vmatprep.subr.mxu0 0.0
    %255 = vmatpush1.msra.mxu0 0.0
    %256 = vmatprep.subr.mxu0 0.0
    %257 = vmatpush1.msra.mxu0 0.0
    %258 = vmatprep.subr.mxu0 0.0
    %259 = vmatpush1.msra.mxu0 0.0
    %260 = vmatprep.subr.mxu0 0.0
    %261 = vmatpush1.msra.mxu0 0.0
    %262 = vmatprep.subr.mxu0 0.0
    %263 = vmatpush1.msra.mxu0 0.0
    %264 = vmatprep.mubr.f32.mxu0 0.0
    %265 = vmatmul.mubr.f32.gmra.mrb[0].mxu0 %v163
    %v266 = vpop.f32.mrb[0].mxu0
    %v267 = vadd.f32 %v199, %v266
    %v268 = vpop.f32.mrb[0].mxu0
    %269 = vmatprep.mubr.f32.mxu0 0.0
    %270 = vmatmul.mubr.f32.gmra.mrb[0].mxu0 %v164
    %v271 = vpop.f32.mrb[0].mxu0
    %v272 = vadd.f32 %v199, %v271
    %v273 = vpop.f32.mrb[0].mxu0
    %274 = vmatprep.mubr.f32.mxu0 0.0
    %275 = vmatmul.mubr.f32.gmra.mrb[0].mxu0 %v165
    %v276 = vpop.f32.mrb[0].mxu0
    %v277 = vadd.f32 %v199, %v276
    %v278 = vpop.f32.mrb[0].mxu0
    %279 = vmatprep.mubr.f32.mxu0 0.0
    %280 = vmatmul.mubr.f32.gmra.mrb[0].mxu0 %v166
    %v281 = vpop.f32.mrb[0].mxu0
    %v282 = vadd.f32 %v199, %v281
    %v283 = vpop.f32.mrb[0].mxu0
    %284 = vmatprep.mubr.f32.mxu0 0.0
    %285 = vmatmul.mubr.f32.gmra.mrb[0].mxu0 %v167
    %v286 = vpop.f32.mrb[0].mxu0
    %v287 = vadd.f32 %v199, %v286
    %v288 = vpop.f32.mrb[0].mxu0
    %289 = vmatprep.mubr.f32.mxu0 0.0
    %290 = vmatmul.mubr.f32.gmra.mrb[0].mxu0 %v168
    %v291 = vpop.f32.mrb[0].mxu0
    %v292 = vadd.f32 %v199, %v291
    %v293 = vpop.f32.mrb[0].mxu0
    %294 = vmatprep.mubr.f32.mxu0 0.0
    %295 = vmatmul.mubr.f32.gmra.mrb[0].mxu0 %v169
    %v296 = vpop.f32.mrb[0].mxu0
    %v297 = vadd.f32 %v199, %v296
    %v298 = vpop.f32.mrb[0].mxu0
    %299 = vmatprep.mubr.f32.mxu0 0.0
    %300 = vmatmul.mubr.f32.gmra.mrb[0].mxu0 %v170
    %v301 = vpop.f32.mrb[0].mxu0
    %v302 = vadd.f32 %v199, %v301
    %v303 = vpop.f32.mrb[0].mxu0
    %304 = vmatprep.mubr.f32.mxu0 0.0
    %305 = vmatmul.mubr.f32.gmra.mrb[0].mxu0 %v171
    %v306 = vpop.f32.mrb[0].mxu0
    %v307 = vadd.f32 %v199, %v306
    %v308 = vpop.f32.mrb[0].mxu0
    %309 = vmatprep.mubr.f32.mxu0 0.0
    %310 = vmatmul.mubr.f32.gmra.mrb[0].mxu0 %v172
    %v311 = vpop.f32.mrb[0].mxu0
    %v312 = vadd.f32 %v199, %v311
    %v313 = vpop.f32.mrb[0].mxu0
    %314 = vmatprep.mubr.f32.mxu0 0.0
    %315 = vmatmul.mubr.f32.gmra.mrb[0].mxu0 %v173
    %v316 = vpop.f32.mrb[0].mxu0
    %v317 = vadd.f32 %v199, %v316
    %v318 = vpop.f32.mrb[0].mxu0
    %319 = vmatprep.mubr.f32.mxu0 0.0
    %320 = vmatmul.mubr.f32.gmra.mrb[0].mxu0 %v174
    %v321 = vpop.f32.mrb[0].mxu0
    %v322 = vadd.f32 %v199, %v321
    %v323 = vpop.f32.mrb[0].mxu0
    %324 = vmatprep.mubr.f32.mxu0 0.0
    %325 = vmatmul.mubr.f32.gmra.mrb[0].mxu0 %v175
    %v326 = vpop.f32.mrb[0].mxu0
    %v327 = vadd.f32 %v199, %v326
    %v328 = vpop.f32.mrb[0].mxu0
    %329 = vmatprep.mubr.f32.mxu0 0.0
    %330 = vmatmul.mubr.f32.gmra.mrb[0].mxu0 %v176
    %v331 = vpop.f32.mrb[0].mxu0
    %v332 = vadd.f32 %v199, %v331
    %v333 = vpop.f32.mrb[0].mxu0
    %334 = vmatprep.mubr.f32.mxu0 0.0
    %335 = vmatmul.mubr.f32.gmra.mrb[0].mxu0 %v177
    %v336 = vpop.f32.mrb[0].mxu0
    %v337 = vadd.f32 %v199, %v336
    %v338 = vpop.f32.mrb[0].mxu0
    %339 = vmatprep.mubr.f32.mxu0 0.0
    %340 = vmatmul.mubr.f32.gmra.mrb[0].mxu0 %v178
    %v341 = vpop.f32.mrb[0].mxu0
    %v342 = vadd.f32 %v199, %v341
    %v343 = vpop.f32.mrb[0].mxu0
    %344 = vdwg.mxu0
    %v345 = vtanh.pop %v267
    %v346 = vtanh.pop %v272
    %v347 = vtanh.pop %v277
    %v348 = vtanh.pop %v282
    %v349 = vtanh.pop %v287
    %v350 = vtanh.pop %v292
    %v351 = vtanh.pop %v297
    %v352 = vtanh.pop %v302
    %v353 = vtanh.pop %v307
    %v354 = vtanh.pop %v312
    %v355 = vtanh.pop %v317
    %v356 = vtanh.pop %v322
    %v357 = vtanh.pop %v327
    %v358 = vtanh.pop %v332
    %v359 = vtanh.pop %v337
    %v360 = vtanh.pop %v342
    %v361 = vld [vmem:[#allocation2 + $0x80] sm:$0xff]
    %v362 = vld [vmem:[#allocation2 + $0x88] sm:$0xff]
    %v363 = vld [vmem:[#allocation2 + $0x90] sm:$0xff]
    %v364 = vld [vmem:[#allocation2 + $0x98] sm:$0xff]
    %v365 = vld [vmem:[#allocation2 + $0xa0] sm:$0xff]
    %v366 = vld [vmem:[#allocation2 + $0xa8] sm:$0xff]
    %v367 = vld [vmem:[#allocation2 + $0xb0] sm:$0xff]
    %v368 = vld [vmem:[#allocation2 + $0xb8] sm:$0xff]
    %v369 = vld [vmem:[#allocation2 + $0xc0] sm:$0xff]
    %v370 = vld [vmem:[#allocation2 + $0xc8] sm:$0xff]
    %v371 = vld [vmem:[#allocation2 + $0xd0] sm:$0xff]
    %v372 = vld [vmem:[#allocation2 + $0xd8] sm:$0xff]
    %v373 = vld [vmem:[#allocation2 + $0xe0] sm:$0xff]
    %v374 = vld [vmem:[#allocation2 + $0xe8] sm:$0xff]
    %v375 = vld [vmem:[#allocation2 + $0xf0] sm:$0xff]
    %v376 = vld [vmem:[#allocation2 + $0xf8] sm:$0xff]
    %v377 = vld [vmem:[#allocation2 + $0x183] sm:$0x1]
    %v378 = vlaneseq
    %v379 = vshrl.u32 %v378, 7
    %v380 = vsub.s32 0, %v379
    %v381 = vrot.slane %v377, %v380
    %382 = vmatprep.subr.mxu0 0.0
    %383 = vmatpush1.msra.mxu0 %v361
    %384 = vmatprep.subr.mxu0 0.0
    %385 = vmatpush1.msra.mxu0 %v362
    %386 = vmatprep.subr.mxu0 0.0
    %387 = vmatpush1.msra.mxu0 %v363
    %388 = vmatprep.subr.mxu0 0.0
    %389 = vmatpush1.msra.mxu0 %v364
    %390 = vmatprep.subr.mxu0 0.0
    %391 = vmatpush1.msra.mxu0 %v365
    %392 = vmatprep.subr.mxu0 0.0
    %393 = vmatpush1.msra.mxu0 %v366
    %394 = vmatprep.subr.mxu0 0.0
    %395 = vmatpush1.msra.mxu0 %v367
    %396 = vmatprep.subr.mxu0 0.0
    %397 = vmatpush1.msra.mxu0 %v368
    %398 = vmatprep.subr.mxu0 0.0
    %399 = vmatpush1.msra.mxu0 %v369
    %400 = vmatprep.subr.mxu0 0.0
    %401 = vmatpush1.msra.mxu0 %v370
    %402 = vmatprep.subr.mxu0 0.0
    %403 = vmatpush1.msra.mxu0 %v371
    %404 = vmatprep.subr.mxu0 0.0
    %405 = vmatpush1.msra.mxu0 %v372
    %406 = vmatprep.subr.mxu0 0.0
    %407 = vmatpush1.msra.mxu0 %v373
    %408 = vmatprep.subr.mxu0 0.0
    %409 = vmatpush1.msra.mxu0 %v374
    %410 = vmatprep.subr.mxu0 0.0
    %411 = vmatpush1.msra.mxu0 %v375
    %412 = vmatprep.subr.mxu0 0.0
    %413 = vmatpush1.msra.mxu0 %v376
    %414 = vmatprep.subr.mxu0 0.0
    %415 = vmatpush1.msra.mxu0 0.0
    %416 = vmatprep.subr.mxu0 0.0
    %417 = vmatpush1.msra.mxu0 0.0
    %418 = vmatprep.subr.mxu0 0.0
    %419 = vmatpush1.msra.mxu0 0.0
    %420 = vmatprep.subr.mxu0 0.0
    %421 = vmatpush1.msra.mxu0 0.0
    %422 = vmatprep.subr.mxu0 0.0
    %423 = vmatpush1.msra.mxu0 0.0
    %424 = vmatprep.subr.mxu0 0.0
    %425 = vmatpush1.msra.mxu0 0.0
    %426 = vmatprep.subr.mxu0 0.0
    %427 = vmatpush1.msra.mxu0 0.0
    %428 = vmatprep.subr.mxu0 0.0
    %429 = vmatpush1.msra.mxu0 0.0
    %430 = vmatprep.subr.mxu0 0.0
    %431 = vmatpush1.msra.mxu0 0.0
    %432 = vmatprep.subr.mxu0 0.0
    %433 = vmatpush1.msra.mxu0 0.0
    %434 = vmatprep.subr.mxu0 0.0
    %435 = vmatpush1.msra.mxu0 0.0
    %436 = vmatprep.subr.mxu0 0.0
    %437 = vmatpush1.msra.mxu0 0.0
    %438 = vmatprep.subr.mxu0 0.0
    %439 = vmatpush1.msra.mxu0 0.0
    %440 = vmatprep.subr.mxu0 0.0
    %441 = vmatpush1.msra.mxu0 0.0
    %442 = vmatprep.subr.mxu0 0.0
    %443 = vmatpush1.msra.mxu0 0.0
    %444 = vmatprep.subr.mxu0 0.0
    %445 = vmatpush1.msra.mxu0 0.0
    %446 = vmatprep.mubr.f32.mxu0 0.0
    %447 = vmatmul.mubr.f32.gmra.mrb[0].mxu0 %v345
    %v448 = vpop.f32.mrb[0].mxu0
    %v449 = vadd.f32 %v381, %v448
    %v450 = vpop.f32.mrb[0].mxu0
    %451 = vmatprep.mubr.f32.mxu0 0.0
    %452 = vmatmul.mubr.f32.gmra.mrb[0].mxu0 %v346
    %v453 = vpop.f32.mrb[0].mxu0
    %v454 = vadd.f32 %v381, %v453
    %v455 = vpop.f32.mrb[0].mxu0
    %456 = vmatprep.mubr.f32.mxu0 0.0
    %457 = vmatmul.mubr.f32.gmra.mrb[0].mxu0 %v347
    %v458 = vpop.f32.mrb[0].mxu0
    %v459 = vadd.f32 %v381, %v458
    %v460 = vpop.f32.mrb[0].mxu0
    %461 = vmatprep.mubr.f32.mxu0 0.0
    %462 = vmatmul.mubr.f32.gmra.mrb[0].mxu0 %v348
    %v463 = vpop.f32.mrb[0].mxu0
    %v464 = vadd.f32 %v381, %v463
    %v465 = vpop.f32.mrb[0].mxu0
    %466 = vmatprep.mubr.f32.mxu0 0.0
    %467 = vmatmul.mubr.f32.gmra.mrb[0].mxu0 %v349
    %v468 = vpop.f32.mrb[0].mxu0
    %v469 = vadd.f32 %v381, %v468
    %v470 = vpop.f32.mrb[0].mxu0
    %471 = vmatprep.mubr.f32.mxu0 0.0
    %472 = vmatmul.mubr.f32.gmra.mrb[0].mxu0 %v350
    %v473 = vpop.f32.mrb[0].mxu0
    %v474 = vadd.f32 %v381, %v473
    %v475 = vpop.f32.mrb[0].mxu0
    %476 = vmatprep.mubr.f32.mxu0 0.0
    %477 = vmatmul.mubr.f32.gmra.mrb[0].mxu0 %v351
    %v478 = vpop.f32.mrb[0].mxu0
    %v479 = vadd.f32 %v381, %v478
    %v480 = vpop.f32.mrb[0].mxu0
    %481 = vmatprep.mubr.f32.mxu0 0.0
    %482 = vmatmul.mubr.f32.gmra.mrb[0].mxu0 %v352
    %v483 = vpop.f32.mrb[0].mxu0
    %v484 = vadd.f32 %v381, %v483
    %v485 = vpop.f32.mrb[0].mxu0
    %486 = vmatprep.mubr.f32.mxu0 0.0
    %487 = vmatmul.mubr.f32.gmra.mrb[0].mxu0 %v353
    %v488 = vpop.f32.mrb[0].mxu0
    %v489 = vadd.f32 %v381, %v488
    %v490 = vpop.f32.mrb[0].mxu0
    %491 = vmatprep.mubr.f32.mxu0 0.0
    %492 = vmatmul.mubr.f32.gmra.mrb[0].mxu0 %v354
    %v493 = vpop.f32.mrb[0].mxu0
    %v494 = vadd.f32 %v381, %v493
    %v495 = vpop.f32.mrb[0].mxu0
    %496 = vmatprep.mubr.f32.mxu0 0.0
    %497 = vmatmul.mubr.f32.gmra.mrb[0].mxu0 %v355
    %v498 = vpop.f32.mrb[0].mxu0
    %v499 = vadd.f32 %v381, %v498
    %v500 = vpop.f32.mrb[0].mxu0
    %501 = vmatprep.mubr.f32.mxu0 0.0
    %502 = vmatmul.mubr.f32.gmra.mrb[0].mxu0 %v356
    %v503 = vpop.f32.mrb[0].mxu0
    %v504 = vadd.f32 %v381, %v503
    %v505 = vpop.f32.mrb[0].mxu0
    %506 = vmatprep.mubr.f32.mxu0 0.0
    %507 = vmatmul.mubr.f32.gmra.mrb[0].mxu0 %v357
    %v508 = vpop.f32.mrb[0].mxu0
    %v509 = vadd.f32 %v381, %v508
    %v510 = vpop.f32.mrb[0].mxu0
    %511 = vmatprep.mubr.f32.mxu0 0.0
    %512 = vmatmul.mubr.f32.gmra.mrb[0].mxu0 %v358
    %v513 = vpop.f32.mrb[0].mxu0
    %v514 = vadd.f32 %v381, %v513
    %v515 = vpop.f32.mrb[0].mxu0
    %516 = vmatprep.mubr.f32.mxu0 0.0
    %517 = vmatmul.mubr.f32.gmra.mrb[0].mxu0 %v359
    %v518 = vpop.f32.mrb[0].mxu0
    %v519 = vadd.f32 %v381, %v518
    %v520 = vpop.f32.mrb[0].mxu0
    %521 = vmatprep.mubr.f32.mxu0 0.0
    %522 = vmatmul.mubr.f32.gmra.mrb[0].mxu0 %v360
    %v523 = vpop.f32.mrb[0].mxu0
    %v524 = vadd.f32 %v381, %v523
    %v525 = vpop.f32.mrb[0].mxu0
    %526 = vdwg.mxu0
    %v527 = vtanh.pop %v449
    %v528 = vtanh.pop %v454
    %v529 = vtanh.pop %v459
    %v530 = vtanh.pop %v464
    %v531 = vtanh.pop %v469
    %v532 = vtanh.pop %v474
    %v533 = vtanh.pop %v479
    %v534 = vtanh.pop %v484
    %v535 = vtanh.pop %v489
    %v536 = vtanh.pop %v494
    %v537 = vtanh.pop %v499
    %v538 = vtanh.pop %v504
    %v539 = vtanh.pop %v509
    %v540 = vtanh.pop %v514
    %v541 = vtanh.pop %v519
    %v542 = vtanh.pop %v524
    %v543 = vld [vmem:[#allocation2 + $0x100] sm:$0xff]
    %v544 = vld [vmem:[#allocation2 + $0x108] sm:$0xff]
    %v545 = vld [vmem:[#allocation2 + $0x110] sm:$0xff]
    %v546 = vld [vmem:[#allocation2 + $0x118] sm:$0xff]
    %v547 = vld [vmem:[#allocation2 + $0x120] sm:$0xff]
    %v548 = vld [vmem:[#allocation2 + $0x128] sm:$0xff]
    %v549 = vld [vmem:[#allocation2 + $0x130] sm:$0xff]
    %v550 = vld [vmem:[#allocation2 + $0x138] sm:$0xff]
    %v551 = vld [vmem:[#allocation2 + $0x140] sm:$0xff]
    %v552 = vld [vmem:[#allocation2 + $0x148] sm:$0xff]
    %v553 = vld [vmem:[#allocation2 + $0x150] sm:$0xff]
    %v554 = vld [vmem:[#allocation2 + $0x158] sm:$0xff]
    %v555 = vld [vmem:[#allocation2 + $0x160] sm:$0xff]
    %v556 = vld [vmem:[#allocation2 + $0x168] sm:$0xff]
    %v557 = vld [vmem:[#allocation2 + $0x170] sm:$0xff]
    %v558 = vld [vmem:[#allocation2 + $0x178] sm:$0xff]
    %v559 = vld [vmem:[#allocation2 + $0x184] sm:$0x1]
    %v560 = vlaneseq
    %v561 = vshrl.u32 %v560, 7
    %v562 = vsub.s32 0, %v561
    %v563 = vrot.slane %v559, %v562
    %564 = vmatprep.subr.mxu0 0.0
    %565 = vmatpush1.msra.mxu0 %v543
    %566 = vmatprep.subr.mxu0 0.0
    %567 = vmatpush1.msra.mxu0 %v544
    %568 = vmatprep.subr.mxu0 0.0
    %569 = vmatpush1.msra.mxu0 %v545
    %570 = vmatprep.subr.mxu0 0.0
    %571 = vmatpush1.msra.mxu0 %v546
    %572 = vmatprep.subr.mxu0 0.0
    %573 = vmatpush1.msra.mxu0 %v547
    %574 = vmatprep.subr.mxu0 0.0
    %575 = vmatpush1.msra.mxu0 %v548
    %576 = vmatprep.subr.mxu0 0.0
    %577 = vmatpush1.msra.mxu0 %v549
    %578 = vmatprep.subr.mxu0 0.0
    %579 = vmatpush1.msra.mxu0 %v550
    %580 = vmatprep.subr.mxu0 0.0
    %581 = vmatpush1.msra.mxu0 %v551
    %582 = vmatprep.subr.mxu0 0.0
    %583 = vmatpush1.msra.mxu0 %v552
    %584 = vmatprep.subr.mxu0 0.0
    %585 = vmatpush1.msra.mxu0 %v553
    %586 = vmatprep.subr.mxu0 0.0
    %587 = vmatpush1.msra.mxu0 %v554
    %588 = vmatprep.subr.mxu0 0.0
    %589 = vmatpush1.msra.mxu0 %v555
    %590 = vmatprep.subr.mxu0 0.0
    %591 = vmatpush1.msra.mxu0 %v556
    %592 = vmatprep.subr.mxu0 0.0
    %593 = vmatpush1.msra.mxu0 %v557
    %594 = vmatprep.subr.mxu0 0.0
    %595 = vmatpush1.msra.mxu0 %v558
    %596 = vmatprep.subr.mxu0 0.0
    %597 = vmatpush1.msra.mxu0 0.0
    %598 = vmatprep.subr.mxu0 0.0
    %599 = vmatpush1.msra.mxu0 0.0
    %600 = vmatprep.subr.mxu0 0.0
    %601 = vmatpush1.msra.mxu0 0.0
    %602 = vmatprep.subr.mxu0 0.0
    %603 = vmatpush1.msra.mxu0 0.0
    %604 = vmatprep.subr.mxu0 0.0
    %605 = vmatpush1.msra.mxu0 0.0
    %606 = vmatprep.subr.mxu0 0.0
    %607 = vmatpush1.msra.mxu0 0.0
    %608 = vmatprep.subr.mxu0 0.0
    %609 = vmatpush1.msra.mxu0 0.0
    %610 = vmatprep.subr.mxu0 0.0
    %611 = vmatpush1.msra.mxu0 0.0
    %612 = vmatprep.subr.mxu0 0.0
    %613 = vmatpush1.msra.mxu0 0.0
    %614 = vmatprep.subr.mxu0 0.0
    %615 = vmatpush1.msra.mxu0 0.0
    %616 = vmatprep.subr.mxu0 0.0
    %617 = vmatpush1.msra.mxu0 0.0
    %618 = vmatprep.subr.mxu0 0.0
    %619 = vmatpush1.msra.mxu0 0.0
    %620 = vmatprep.subr.mxu0 0.0
    %621 = vmatpush1.msra.mxu0 0.0
    %622 = vmatprep.subr.mxu0 0.0
    %623 = vmatpush1.msra.mxu0 0.0
    %624 = vmatprep.subr.mxu0 0.0
    %625 = vmatpush1.msra.mxu0 0.0
    %626 = vmatprep.subr.mxu0 0.0
    %627 = vmatpush1.msra.mxu0 0.0
    %628 = vmatprep.mubr.f32.mxu0 0.0
    %629 = vmatmul.mubr.f32.gmra.mrb[0].mxu0 %v527
    %v630 = vpop.f32.mrb[0].mxu0
    %v631 = vadd.f32 %v563, %v630
    %v632 = vpop.f32.mrb[0].mxu0
    %633 = vmatprep.mubr.f32.mxu0 0.0
    %634 = vmatmul.mubr.f32.gmra.mrb[0].mxu0 %v528
    %v635 = vpop.f32.mrb[0].mxu0
    %v636 = vadd.f32 %v563, %v635
    %v637 = vpop.f32.mrb[0].mxu0
    %638 = vmatprep.mubr.f32.mxu0 0.0
    %639 = vmatmul.mubr.f32.gmra.mrb[0].mxu0 %v529
    %v640 = vpop.f32.mrb[0].mxu0
    %v641 = vadd.f32 %v563, %v640
    %v642 = vpop.f32.mrb[0].mxu0
    %643 = vmatprep.mubr.f32.mxu0 0.0
    %644 = vmatmul.mubr.f32.gmra.mrb[0].mxu0 %v530
    %v645 = vpop.f32.mrb[0].mxu0
    %v646 = vadd.f32 %v563, %v645
    %v647 = vpop.f32.mrb[0].mxu0
    %648 = vmatprep.mubr.f32.mxu0 0.0
    %649 = vmatmul.mubr.f32.gmra.mrb[0].mxu0 %v531
    %v650 = vpop.f32.mrb[0].mxu0
    %v651 = vadd.f32 %v563, %v650
    %v652 = vpop.f32.mrb[0].mxu0
    %653 = vmatprep.mubr.f32.mxu0 0.0
    %654 = vmatmul.mubr.f32.gmra.mrb[0].mxu0 %v532
    %v655 = vpop.f32.mrb[0].mxu0
    %v656 = vadd.f32 %v563, %v655
    %v657 = vpop.f32.mrb[0].mxu0
    %658 = vmatprep.mubr.f32.mxu0 0.0
    %659 = vmatmul.mubr.f32.gmra.mrb[0].mxu0 %v533
    %v660 = vpop.f32.mrb[0].mxu0
    %v661 = vadd.f32 %v563, %v660
    %v662 = vpop.f32.mrb[0].mxu0
    %663 = vmatprep.mubr.f32.mxu0 0.0
    %664 = vmatmul.mubr.f32.gmra.mrb[0].mxu0 %v534
    %v665 = vpop.f32.mrb[0].mxu0
    %v666 = vadd.f32 %v563, %v665
    %v667 = vpop.f32.mrb[0].mxu0
    %668 = vmatprep.mubr.f32.mxu0 0.0
    %669 = vmatmul.mubr.f32.gmra.mrb[0].mxu0 %v535
    %v670 = vpop.f32.mrb[0].mxu0
    %v671 = vadd.f32 %v563, %v670
    %v672 = vpop.f32.mrb[0].mxu0
    %673 = vmatprep.mubr.f32.mxu0 0.0
    %674 = vmatmul.mubr.f32.gmra.mrb[0].mxu0 %v536
    %v675 = vpop.f32.mrb[0].mxu0
    %v676 = vadd.f32 %v563, %v675
    %v677 = vpop.f32.mrb[0].mxu0
    %678 = vmatprep.mubr.f32.mxu0 0.0
    %679 = vmatmul.mubr.f32.gmra.mrb[0].mxu0 %v537
    %v680 = vpop.f32.mrb[0].mxu0
    %v681 = vadd.f32 %v563, %v680
    %v682 = vpop.f32.mrb[0].mxu0
    %683 = vmatprep.mubr.f32.mxu0 0.0
    %684 = vmatmul.mubr.f32.gmra.mrb[0].mxu0 %v538
    %v685 = vpop.f32.mrb[0].mxu0
    %v686 = vadd.f32 %v563, %v685
    %v687 = vpop.f32.mrb[0].mxu0
    %688 = vmatprep.mubr.f32.mxu0 0.0
    %689 = vmatmul.mubr.f32.gmra.mrb[0].mxu0 %v539
    %v690 = vpop.f32.mrb[0].mxu0
    %v691 = vadd.f32 %v563, %v690
    %v692 = vpop.f32.mrb[0].mxu0
    %693 = vmatprep.mubr.f32.mxu0 0.0
    %694 = vmatmul.mubr.f32.gmra.mrb[0].mxu0 %v540
    %v695 = vpop.f32.mrb[0].mxu0
    %v696 = vadd.f32 %v563, %v695
    %v697 = vpop.f32.mrb[0].mxu0
    %698 = vmatprep.mubr.f32.mxu0 0.0
    %699 = vmatmul.mubr.f32.gmra.mrb[0].mxu0 %v541
    %v700 = vpop.f32.mrb[0].mxu0
    %v701 = vadd.f32 %v563, %v700
    %v702 = vpop.f32.mrb[0].mxu0
    %703 = vmatprep.mubr.f32.mxu0 0.0
    %704 = vmatmul.mubr.f32.gmra.mrb[0].mxu0 %v542
    %v705 = vpop.f32.mrb[0].mxu0
    %v706 = vadd.f32 %v563, %v705
    %v707 = vpop.f32.mrb[0].mxu0
    %708 = vdwg.mxu0
    %v709 = vtanh.pop %v631
    %v710 = vtanh.pop %v636
    %v711 = vtanh.pop %v641
    %v712 = vtanh.pop %v646
    %v713 = vtanh.pop %v651
    %v714 = vtanh.pop %v656
    %v715 = vtanh.pop %v661
    %v716 = vtanh.pop %v666
    %v717 = vtanh.pop %v671
    %v718 = vtanh.pop %v676
    %v719 = vtanh.pop %v681
    %v720 = vtanh.pop %v686
    %v721 = vtanh.pop %v691
    %v722 = vtanh.pop %v696
    %v723 = vtanh.pop %v701
    %v724 = vtanh.pop %v706
    %v725 = vld [vmem:[#allocation2 + $0x185] sm:$0x1]
    %v726 = vld [vmem:[#allocation2 + $0x186] sm:$0x1]
    %727 = vmatprep.subr.mxu0 0.0
    %728 = vmatpush1.xpose.msra.mxu0 %v709
    %729 = vmatprep.subr.mxu0 0.0
    %730 = vmatpush1.xpose.msra.mxu0 %v710
    %731 = vmatprep.subr.mxu0 0.0
    %732 = vmatpush1.xpose.msra.mxu0 %v711
    %733 = vmatprep.subr.mxu0 0.0
    %734 = vmatpush1.xpose.msra.mxu0 %v712
    %735 = vmatprep.subr.mxu0 0.0
    %736 = vmatpush1.xpose.msra.mxu0 %v713
    %737 = vmatprep.subr.mxu0 0.0
    %738 = vmatpush1.xpose.msra.mxu0 %v714
    %739 = vmatprep.subr.mxu0 0.0
    %740 = vmatpush1.xpose.msra.mxu0 %v715
    %741 = vmatprep.subr.mxu0 0.0
    %742 = vmatpush1.xpose.msra.mxu0 %v716
    %743 = vmatprep.subr.mxu0 0.0
    %744 = vmatpush1.xpose.msra.mxu0 %v717
    %745 = vmatprep.subr.mxu0 0.0
    %746 = vmatpush1.xpose.msra.mxu0 %v718
    %747 = vmatprep.subr.mxu0 0.0
    %748 = vmatpush1.xpose.msra.mxu0 %v719
    %749 = vmatprep.subr.mxu0 0.0
    %750 = vmatpush1.xpose.msra.mxu0 %v720
    %751 = vmatprep.subr.mxu0 0.0
    %752 = vmatpush1.xpose.msra.mxu0 %v721
    %753 = vmatprep.subr.mxu0 0.0
    %754 = vmatpush1.xpose.msra.mxu0 %v722
    %755 = vmatprep.subr.mxu0 0.0
    %756 = vmatpush1.xpose.msra.mxu0 %v723
    %757 = vmatprep.subr.mxu0 0.0
    %758 = vmatpush1.xpose.msra.mxu0 %v724
    %759 = vmatprep.subr.mxu0 0.0
    %760 = vmatpush1.xpose.msra.mxu0 0.0
    %761 = vmatprep.subr.mxu0 0.0
    %762 = vmatpush1.xpose.msra.mxu0 0.0
    %763 = vmatprep.subr.mxu0 0.0
    %764 = vmatpush1.xpose.msra.mxu0 0.0
    %765 = vmatprep.subr.mxu0 0.0
    %766 = vmatpush1.xpose.msra.mxu0 0.0
    %767 = vmatprep.subr.mxu0 0.0
    %768 = vmatpush1.xpose.msra.mxu0 0.0
    %769 = vmatprep.subr.mxu0 0.0
    %770 = vmatpush1.xpose.msra.mxu0 0.0
    %771 = vmatprep.subr.mxu0 0.0
    %772 = vmatpush1.xpose.msra.mxu0 0.0
    %773 = vmatprep.subr.mxu0 0.0
    %774 = vmatpush1.xpose.msra.mxu0 0.0
    %775 = vmatprep.subr.mxu0 0.0
    %776 = vmatpush1.xpose.msra.mxu0 0.0
    %777 = vmatprep.subr.mxu0 0.0
    %778 = vmatpush1.xpose.msra.mxu0 0.0
    %779 = vmatprep.subr.mxu0 0.0
    %780 = vmatpush1.xpose.msra.mxu0 0.0
    %781 = vmatprep.subr.mxu0 0.0
    %782 = vmatpush1.xpose.msra.mxu0 0.0
    %783 = vmatprep.subr.mxu0 0.0
    %784 = vmatpush1.xpose.msra.mxu0 0.0
    %785 = vmatprep.subr.mxu0 0.0
    %786 = vmatpush1.xpose.msra.mxu0 0.0
    %787 = vmatprep.subr.mxu0 0.0
    %788 = vmatpush1.xpose.msra.mxu0 0.0
    %789 = vmatprep.subr.mxu0 0.0
    %790 = vmatpush1.xpose.msra.mxu0 0.0
    %791 = vmatprep.mubr.f32.mxu0 0.0
    %792 = vmatmul.mubr.f32.gmra.mrb[0].mxu0 %v725
    %v793 = vpop.f32.mrb[0].mxu0
    %v794 = vadd.f32 %v726, %v793
    %v795 = vpop.f32.mrb[0].mxu0
    %796 = vdwg.mxu0
    %v797 = vlaneseq
    %v798 = vshrl.u32 %v797, 7
    %v799 = vsub.s32 0, %v798
    %v800 = vrot.slane %v794, %v799
    %801 = vst [vmem:[%s2] sm:$0xff] %v800
    // Predicated region
    $region14: #{net1_forward.1} parent=1 // pred_check
      _
    $region15: #{net1_forward.1} parent=1 // pred_check_branch
      %803 = sbr.rel (0) target = $region17
    $region16: #{net1_forward.1} parent=1 // pred_region
      _
    $region17: #{net1_forward.1} parent=1 // pred_fallthru
      _
    // Predicated region
    $region18: #{net1_forward.1} parent=1 // pred_check
      _
    $region19: #{net1_forward.1} parent=1 // pred_check_branch
      %805 = sbr.rel (0) target = $region21
    $region20: #{net1_forward.1} parent=1 // pred_region
      _
    $region21: #{net1_forward.1} parent=1 // pred_fallthru
      _
    %806 = vsyncpa [#allocation3], 1

</llo_original>
